<compile_context>
chip_gen: v7x
topology: tpu7x:2x2x1
jax: 0.10.0
libtpu: 0.0.40
codegen_flags: <defaults>
</compile_context>

<pallas_src>
import math

import jax
import jax.numpy as jnp
from jax import lax
from jax.experimental import pallas as pl
from jax.experimental.pallas import tpu as pltpu

BN_EPS = 1e-5
LANES = 128


def _round_up(n, m):
    return (n + m - 1) // m * m


def _bn_relu(h, gamma, beta):
    """Training-mode BatchNorm1d + ReLU, single elementwise pass, f32."""
    inv_b = 1.0 / h.shape[0]
    mu = jnp.sum(h, axis=0, keepdims=True) * inv_b
    ex2 = jnp.sum(h * h, axis=0, keepdims=True) * inv_b
    var = jnp.maximum(ex2 - mu * mu, 0.0)          # guard tiny negative
    scale = lax.rsqrt(var + BN_EPS) * gamma        # [1, N], EUP rsqrt
    return jnp.maximum((h - mu) * scale + beta, 0.0)


def _make_decoder_kernel(num_linear):
    """Kernel operand order: x, (w, gamma, beta) per hidden layer...,
    w_last, b_last, out.  Hidden Linear biases are omitted (BN cancels them)."""

    def kernel(*refs):
        x_ref = refs[0]
        o_ref = refs[-1]
        p_refs = refs[1:-1]

        h = x_ref[...]
        idx = 0
        for li in range(num_linear):
            w = p_refs[idx][...]                   # pre-cast bf16 weight
            idx += 1
            # bf16 operands -> native MXU passes; accumulate in f32.
            h = jnp.dot(h.astype(jnp.bfloat16), w,
                        preferred_element_type=jnp.float32)
            if li < num_linear - 1:
                gamma = p_refs[idx][...]
                beta = p_refs[idx + 1][...]
                idx += 2
                h = _bn_relu(h, gamma, beta)       # f32 elementwise
            else:
                h = h + p_refs[idx][...]           # final Linear keeps its bias
                idx += 1
        o_ref[...] = h.astype(o_ref.dtype)

    return kernel


def init_decoder_params(key, in_dim, h_dim_list, bottleneck_dim):
    """Raw PyTorch-style parameters (f32, unpadded).

    Per Linear: weight stored as [in, out] (transpose of PyTorch's [out, in])
    and bias [1, out], init U(+-1/sqrt(fan_in)).  Per hidden layer:
    BatchNorm1d gamma=1, beta=0.  Returns list of (w, b, gamma, beta) tuples
    (gamma/beta are None for the final layer) and the dim list."""
    h_dim_list = list(h_dim_list)
    h_dim_list.reverse()
    dims = [bottleneck_dim] + h_dim_list + [in_dim]

    layers = []
    for i in range(len(dims) - 1):
        fan_in, fan_out = dims[i], dims[i + 1]
        key, kw, kb = jax.random.split(key, 3)
        bound = 1.0 / math.sqrt(fan_in)
        w = jax.random.uniform(kw, (fan_in, fan_out), jnp.float32, -bound, bound)
        b = jax.random.uniform(kb, (1, fan_out), jnp.float32, -bound, bound)
        if i < len(dims) - 2:
            gamma = jnp.ones((1, fan_out), jnp.float32)
            beta = jnp.zeros((1, fan_out), jnp.float32)
            layers.append((w, b, gamma, beta))
        else:
            layers.append((w, b, None, None))
    return layers, dims


def prepare_decoder_params(layers, dims):
    """Raw params -> flat kernel operand list.

    * drops hidden-layer Linear biases (exactly cancelled by training-mode BN),
    * zero-pads hidden feature dims to multiples of 128 lanes (exact),
    * casts matmul weights to bf16 once, host-side."""
    num_linear = len(layers)
    padded = [dims[0]]                             # never pad the input dim
    for i in range(1, len(dims) - 1):
        padded.append(_round_up(dims[i], LANES))
    padded.append(dims[-1])                        # keep the module's out dim

    flat = []
    for i, (w, b, gamma, beta) in enumerate(layers):
        d_in, d_out = dims[i], dims[i + 1]
        p_in, p_out = padded[i], padded[i + 1]
        w_p = jnp.zeros((p_in, p_out), jnp.float32).at[:d_in, :d_out].set(w)
        flat.append(w_p.astype(jnp.bfloat16))
        if i < num_linear - 1:
            g_p = jnp.zeros((1, p_out), jnp.float32).at[:, :d_out].set(gamma)
            be_p = jnp.zeros((1, p_out), jnp.float32).at[:, :d_out].set(beta)
            flat.extend([g_p, be_p])
            # hidden Linear bias `b` intentionally dropped (BN cancels it)
        else:
            flat.append(b)                         # final f32 bias
    return flat, padded


def decoder_forward(x, kernel_params, num_linear, out_dim):
    """x: [B, bottleneck_dim] f32.  kernel_params: from prepare_decoder_params."""
    B = x.shape[0]
    kernel = _make_decoder_kernel(num_linear)
    vmem = pl.BlockSpec(memory_space=pltpu.MemorySpace.VMEM)

    # Advisory cost estimate for the XLA scheduler.
    w_out_dims = [int(p.shape[1]) for p in kernel_params
                  if p.ndim == 2 and p.shape[0] > 1]
    w_in_dims = [int(p.shape[0]) for p in kernel_params
                 if p.ndim == 2 and p.shape[0] > 1]
    flops = sum(2 * B * di * do for di, do in zip(w_in_dims, w_out_dims))
    param_bytes = sum(int(p.nbytes) for p in kernel_params)
    out_bytes = B * out_dim * 4
    bytes_accessed = int(x.nbytes) + out_bytes + param_bytes
    transcendentals = sum(w_out_dims[:-1])         # one rsqrt lane per BN feat

    # Whole-batch-in-VMEM budget (activations f32 + bf16 copies + params),
    # 2x headroom; safe fixed floor of 32 MiB on all chips (<= v7x physical).
    act_bytes = 4 * B * (int(x.shape[1]) + sum(w_out_dims))
    vmem_limit = int(max(32 * 2**20, 2 * (2 * act_bytes + param_bytes
                                          + int(x.nbytes) + out_bytes)))

    return pl.pallas_call(
        kernel,
        out_shape=jax.ShapeDtypeStruct((B, out_dim), jnp.float32),
        in_specs=[vmem] * (1 + len(kernel_params)),
        out_specs=vmem,
        compiler_params=pltpu.CompilerParams(vmem_limit_bytes=vmem_limit),
        cost_estimate=pl.CostEstimate(flops=flops,
                                      transcendentals=transcendentals,
                                      bytes_accessed=bytes_accessed),
    )(x, *kernel_params)


def decoder_reference_f32(x, layers):
    """Pure-JAX f32 reference identical to the PyTorch module (training BN)."""
    h = x
    n = len(layers)
    for i, (w, b, gamma, beta) in enumerate(layers):
        h = h @ w + b
        if i < n - 1:
            mu = jnp.mean(h, axis=0, keepdims=True)
            var = jnp.mean((h - mu) ** 2, axis=0, keepdims=True)
            h = jnp.maximum((h - mu) / jnp.sqrt(var + BN_EPS) * gamma + beta, 0.0)
    return h


def decoder_reference_bf16(x, layers):
    """Reference mimicking the kernel arithmetic (bf16 dot operands, f32
    accumulation / BN, hidden biases dropped) for a tight-tolerance check.
    Bias-drop and lane-padding are mathematically exact, so this is the
    kernel's math without the padding plumbing."""
    h = x
    n = len(layers)
    for i, (w, b, gamma, beta) in enumerate(layers):
        h = jnp.dot(h.astype(jnp.bfloat16), w.astype(jnp.bfloat16),
                    preferred_element_type=jnp.float32)
        if i < n - 1:
            h = _bn_relu(h, gamma, beta)
        else:
            h = h + b
    return h


if __name__ == "__main__":
    # Small, deterministic example consistent with the module:
    #   Decoder(in_dim=256, h_dim_list=[64, 128], bottleneck_dim=32)
    #   -> dims = [32, 128, 64, 256]: three Linear layers, two BN+ReLU blocks.
    in_dim, h_dim_list, bottleneck_dim = 256, [64, 128], 32
    batch = 8

    key = jax.random.PRNGKey(0)
    key, kx, kp = jax.random.split(key, 3)
    layers, dims = init_decoder_params(kp, in_dim, h_dim_list, bottleneck_dim)
    x = jax.random.normal(kx, (batch, bottleneck_dim), jnp.float32)

    kernel_params, padded_dims = prepare_decoder_params(layers, dims)
    out = jax.block_until_ready(
        decoder_forward(x, kernel_params, num_linear=len(layers), out_dim=in_dim))
    assert out.shape == (batch, in_dim), out.shape

    # Tight check: against a reference performing the same bf16-operand MXU
    # math (bias-drop and zero-padding are exact transformations).
    ref_bf16 = decoder_reference_bf16(x, layers)
    assert jnp.allclose(out, ref_bf16, atol=5e-3, rtol=5e-3), \
        "mismatch vs bf16-math reference"

    # Loose sanity check: against the full-f32 PyTorch-equivalent module; the
    # only difference is bf16 quantization of the matmul operands.
    ref_f32 = decoder_reference_f32(x, layers)
    assert jnp.allclose(out, ref_f32, atol=6e-2, rtol=6e-2), \
        "mismatch vs f32 reference"

    print("KERNEL_OK")
</pallas_src>

<mosaic_0001>
module attributes {stable_mosaic.version = 11 : i64} {
  func.func @kernel(%arg0: memref<8x32xf32, #tpu.memory_space<vmem>>, %arg1: memref<32x128xbf16, #tpu.memory_space<vmem>>, %arg2: memref<1x128xf32, #tpu.memory_space<vmem>>, %arg3: memref<1x128xf32, #tpu.memory_space<vmem>>, %arg4: memref<128x128xbf16, #tpu.memory_space<vmem>>, %arg5: memref<1x128xf32, #tpu.memory_space<vmem>>, %arg6: memref<1x128xf32, #tpu.memory_space<vmem>>, %arg7: memref<128x256xbf16, #tpu.memory_space<vmem>>, %arg8: memref<1x256xf32, #tpu.memory_space<vmem>>, %arg9: memref<8x256xf32, #tpu.memory_space<vmem>>) attributes {dimension_semantics = [], scalar_prefetch = 0 : i64, scratch_operands = 0 : i64, tpu.core_type = #tpu.core_type<tc>} {
    %c0 = arith.constant 0 : index
    %c0_0 = arith.constant 0 : index
    %0 = vector.load %arg0[%c0, %c0_0] : memref<8x32xf32, #tpu.memory_space<vmem>>, vector<8x32xf32>
    %c0_1 = arith.constant 0 : index
    %c0_2 = arith.constant 0 : index
    %1 = vector.load %arg1[%c0_1, %c0_2] : memref<32x128xbf16, #tpu.memory_space<vmem>>, vector<32x128xbf16>
    %2 = arith.truncf %0 : vector<8x32xf32> to vector<8x32xbf16>
    %cst = arith.constant dense<0.000000e+00> : vector<8x128xf32>
    %3 = tpu.matmul %2, %1, %cst {dimension_numbers = #tpu.dot_dimension_numbers<[1], [0], [0], [1], [0, 0, 1, 1], [], []>} : vector<8x32xbf16>, vector<32x128xbf16>, vector<8x128xf32> -> vector<8x128xf32>
    %c0_3 = arith.constant 0 : index
    %c0_4 = arith.constant 0 : index
    %4 = vector.load %arg2[%c0_3, %c0_4] : memref<1x128xf32, #tpu.memory_space<vmem>>, vector<1x128xf32>
    %c0_5 = arith.constant 0 : index
    %c0_6 = arith.constant 0 : index
    %5 = vector.load %arg3[%c0_5, %c0_6] : memref<1x128xf32, #tpu.memory_space<vmem>>, vector<1x128xf32>
    %cst_7 = arith.constant dense<0.000000e+00> : vector<128xf32>
    %6 = vector.multi_reduction <add>, %3, %cst_7 [0] : vector<8x128xf32> to vector<128xf32>
    %7 = vector.shape_cast %6 : vector<128xf32> to vector<1x128xf32>
    %cst_8 = arith.constant 1.250000e-01 : f32
    %8 = vector.broadcast %cst_8 : f32 to vector<1x128xf32>
    %9 = arith.mulf %7, %8 : vector<1x128xf32>
    %10 = arith.mulf %3, %3 : vector<8x128xf32>
    %cst_9 = arith.constant dense<0.000000e+00> : vector<128xf32>
    %11 = vector.multi_reduction <add>, %10, %cst_9 [0] : vector<8x128xf32> to vector<128xf32>
    %12 = vector.shape_cast %11 : vector<128xf32> to vector<1x128xf32>
    %cst_10 = arith.constant 1.250000e-01 : f32
    %13 = vector.broadcast %cst_10 : f32 to vector<1x128xf32>
    %14 = arith.mulf %12, %13 : vector<1x128xf32>
    %15 = arith.mulf %9, %9 : vector<1x128xf32>
    %16 = arith.subf %14, %15 : vector<1x128xf32>
    %cst_11 = arith.constant 0.000000e+00 : f32
    %17 = vector.broadcast %cst_11 : f32 to vector<1x128xf32>
    %18 = arith.maximumf %16, %17 : vector<1x128xf32>
    %cst_12 = arith.constant 9.99999974E-6 : f32
    %19 = vector.broadcast %cst_12 : f32 to vector<1x128xf32>
    %20 = arith.addf %18, %19 : vector<1x128xf32>
    %21 = math.rsqrt %20 : vector<1x128xf32>
    %22 = arith.mulf %21, %4 : vector<1x128xf32>
    %23 = vector.broadcast %9 : vector<1x128xf32> to vector<8x128xf32>
    %24 = arith.subf %3, %23 : vector<8x128xf32>
    %25 = vector.broadcast %22 : vector<1x128xf32> to vector<8x128xf32>
    %26 = arith.mulf %24, %25 : vector<8x128xf32>
    %27 = vector.broadcast %5 : vector<1x128xf32> to vector<8x128xf32>
    %28 = arith.addf %26, %27 : vector<8x128xf32>
    %cst_13 = arith.constant 0.000000e+00 : f32
    %29 = vector.broadcast %cst_13 : f32 to vector<8x128xf32>
    %30 = arith.maximumf %28, %29 : vector<8x128xf32>
    %c0_14 = arith.constant 0 : index
    %c0_15 = arith.constant 0 : index
    %31 = vector.load %arg4[%c0_14, %c0_15] : memref<128x128xbf16, #tpu.memory_space<vmem>>, vector<128x128xbf16>
    %32 = arith.truncf %30 : vector<8x128xf32> to vector<8x128xbf16>
    %cst_16 = arith.constant dense<0.000000e+00> : vector<8x128xf32>
    %33 = tpu.matmul %32, %31, %cst_16 {dimension_numbers = #tpu.dot_dimension_numbers<[1], [0], [0], [1], [0, 0, 1, 1], [], []>} : vector<8x128xbf16>, vector<128x128xbf16>, vector<8x128xf32> -> vector<8x128xf32>
    %c0_17 = arith.constant 0 : index
    %c0_18 = arith.constant 0 : index
    %34 = vector.load %arg5[%c0_17, %c0_18] : memref<1x128xf32, #tpu.memory_space<vmem>>, vector<1x128xf32>
    %c0_19 = arith.constant 0 : index
    %c0_20 = arith.constant 0 : index
    %35 = vector.load %arg6[%c0_19, %c0_20] : memref<1x128xf32, #tpu.memory_space<vmem>>, vector<1x128xf32>
    %cst_21 = arith.constant dense<0.000000e+00> : vector<128xf32>
    %36 = vector.multi_reduction <add>, %33, %cst_21 [0] : vector<8x128xf32> to vector<128xf32>
    %37 = vector.shape_cast %36 : vector<128xf32> to vector<1x128xf32>
    %cst_22 = arith.constant 1.250000e-01 : f32
    %38 = vector.broadcast %cst_22 : f32 to vector<1x128xf32>
    %39 = arith.mulf %37, %38 : vector<1x128xf32>
    %40 = arith.mulf %33, %33 : vector<8x128xf32>
    %cst_23 = arith.constant dense<0.000000e+00> : vector<128xf32>
    %41 = vector.multi_reduction <add>, %40, %cst_23 [0] : vector<8x128xf32> to vector<128xf32>
    %42 = vector.shape_cast %41 : vector<128xf32> to vector<1x128xf32>
    %cst_24 = arith.constant 1.250000e-01 : f32
    %43 = vector.broadcast %cst_24 : f32 to vector<1x128xf32>
    %44 = arith.mulf %42, %43 : vector<1x128xf32>
    %45 = arith.mulf %39, %39 : vector<1x128xf32>
    %46 = arith.subf %44, %45 : vector<1x128xf32>
    %cst_25 = arith.constant 0.000000e+00 : f32
    %47 = vector.broadcast %cst_25 : f32 to vector<1x128xf32>
    %48 = arith.maximumf %46, %47 : vector<1x128xf32>
    %cst_26 = arith.constant 9.99999974E-6 : f32
    %49 = vector.broadcast %cst_26 : f32 to vector<1x128xf32>
    %50 = arith.addf %48, %49 : vector<1x128xf32>
    %51 = math.rsqrt %50 : vector<1x128xf32>
    %52 = arith.mulf %51, %34 : vector<1x128xf32>
    %53 = vector.broadcast %39 : vector<1x128xf32> to vector<8x128xf32>
    %54 = arith.subf %33, %53 : vector<8x128xf32>
    %55 = vector.broadcast %52 : vector<1x128xf32> to vector<8x128xf32>
    %56 = arith.mulf %54, %55 : vector<8x128xf32>
    %57 = vector.broadcast %35 : vector<1x128xf32> to vector<8x128xf32>
    %58 = arith.addf %56, %57 : vector<8x128xf32>
    %cst_27 = arith.constant 0.000000e+00 : f32
    %59 = vector.broadcast %cst_27 : f32 to vector<8x128xf32>
    %60 = arith.maximumf %58, %59 : vector<8x128xf32>
    %c0_28 = arith.constant 0 : index
    %c0_29 = arith.constant 0 : index
    %61 = vector.load %arg7[%c0_28, %c0_29] : memref<128x256xbf16, #tpu.memory_space<vmem>>, vector<128x256xbf16>
    %62 = arith.truncf %60 : vector<8x128xf32> to vector<8x128xbf16>
    %cst_30 = arith.constant dense<0.000000e+00> : vector<8x256xf32>
    %63 = tpu.matmul %62, %61, %cst_30 {dimension_numbers = #tpu.dot_dimension_numbers<[1], [0], [0], [1], [0, 0, 1, 1], [], []>} : vector<8x128xbf16>, vector<128x256xbf16>, vector<8x256xf32> -> vector<8x256xf32>
    %c0_31 = arith.constant 0 : index
    %c0_32 = arith.constant 0 : index
    %64 = vector.load %arg8[%c0_31, %c0_32] : memref<1x256xf32, #tpu.memory_space<vmem>>, vector<1x256xf32>
    %65 = vector.broadcast %64 : vector<1x256xf32> to vector<8x256xf32>
    %66 = arith.addf %63, %65 : vector<8x256xf32>
    %c0_33 = arith.constant 0 : index
    %c0_34 = arith.constant 0 : index
    %67 = vector.load %arg9[%c0_33, %c0_34] : memref<8x256xf32, #tpu.memory_space<vmem>>, vector<8x256xf32>
    tpu.vector_store %arg9[%c0_33, %c0_34], %66 {strides = array<i32>} : memref<8x256xf32, #tpu.memory_space<vmem>>, vector<8x256xf32>,
    return
  }
}

</mosaic_0001>

<llo_original>
// kernel: tpu_custom_call.1
$region0: #{tpu_custom_call.1}
  #allocation0 [shape = 'u32[]', space=smem, size = 0x4, offset = 0x4, fixed_abs, tag = 'smem constant byte address 0x4 - core index']
  #allocation1 [shape = 'u32[144,128]{1,0:T(1,128)}', space=vmem, size = 0x12000, scoped, tag = 'internal scratch']
  %s0 = inlined_call_operand.hbm [shape: f32[8,32], index: 0, kind: input, shape index: {}]
  %s1 = inlined_call_operand.hbm [shape: bf16[32,128], index: 1, kind: input, shape index: {}]
  %s2 = inlined_call_operand.vmem [shape: f32[1,128], index: 2, kind: input, shape index: {}]
  %s3 = inlined_call_operand.vmem [shape: f32[1,128], index: 3, kind: input, shape index: {}]
  %s4 = inlined_call_operand.hbm [shape: bf16[128,128], index: 4, kind: input, shape index: {}]
  %s5 = inlined_call_operand.vmem [shape: f32[1,128], index: 5, kind: input, shape index: {}]
  %s6 = inlined_call_operand.vmem [shape: f32[1,128], index: 6, kind: input, shape index: {}]
  %s7 = inlined_call_operand.hbm [shape: bf16[128,256], index: 7, kind: input, shape index: {}]
  %s8 = inlined_call_operand.vmem [shape: f32[1,256], index: 8, kind: input, shape index: {}]
  %s9 = inlined_call_operand.hbm [shape: f32[8,256], index: 9, kind: output, shape index: {}]
  %s10 = sld [smem:[#allocation0]]
  $region62: #{tpu_custom_call.1} parent=0
    _
  %s12 = ssub.s32 1, %s10
  %s13 = scalar_select 0, %s12, %s10
  $region1: #{tpu_custom_call.1} parent=0
    #allocation2 [shape = 'u8[4096]{0}', space=vmem, size = 0x1000, scoped, tag = 'input window, operand 0, single buffered']
    #allocation3 [shape = 's32[1]{0}', space=sflag, size = 0x4, scoped, tag = 'scoped memory for tpu_custom_call.1']
    #allocation4 [shape = 's32[1]{0}', space=sflag, size = 0x4, scoped, tag = 'scoped memory for tpu_custom_call.1']
    #allocation5 [shape = 'u8[8192]{0}', space=vmem, size = 0x2000, scoped, tag = 'input window, operand 1, single buffered']
    #allocation6 [shape = 's32[1]{0}', space=sflag, size = 0x4, scoped, tag = 'scoped memory for tpu_custom_call.1']
    #allocation7 [shape = 'u8[32768]{0}', space=vmem, size = 0x8000, scoped, tag = 'input window, operand 4, single buffered']
    #allocation8 [shape = 'u8[65536]{0}', space=vmem, size = 0x10000, scoped, tag = 'input window, operand 7, single buffered']
    #allocation9 [shape = 's32[1]{0}', space=sflag, size = 0x4, scoped, tag = 'scoped memory for tpu_custom_call.1']
    #allocation10 [shape = 'u8[8192]{0}', space=vmem, size = 0x2000, scoped, tag = 'output window, operand 0, single buffered']
    %14 = vsyncpa [#allocation3], 0
    %15 = vsyncpa [#allocation6], 0
    %16 = vsyncpa [#allocation9], 0
    %17 = vsyncpa [#allocation4], 0
    // Predicated region
    $region2: #{tpu_custom_call.1} parent=1 // pred_check
      _
    $region3: #{tpu_custom_call.1} parent=1 // pred_check_branch
      %19 = sbr.rel (0) target = $region5
    $region4: #{tpu_custom_call.1} parent=1 // pred_region
      %s21 = ssub.s32 128, 128
      %22 = vsyncadd [#allocation3], %s21
      %s24 = sshll.u32 [#allocation2], 4
      %s25 = int_to_ptr.vmem [resolvable:$true] %s24
      %27 = dma.hbm_to_vmem [thread:$0]  %s0, 128, %s25, [#allocation3]
    $region5: #{tpu_custom_call.1} parent=1 // pred_fallthru
      _
    // Predicated region
    $region6: #{tpu_custom_call.1} parent=1 // pred_check
      _
    $region7: #{tpu_custom_call.1} parent=1 // pred_check_branch
      %29 = sbr.rel (0) target = $region9
    $region8: #{tpu_custom_call.1} parent=1 // pred_region
      %s31 = ssub.s32 256, 256
      %32 = vsyncadd [#allocation6], %s31
      %s33 = sshll.u32 [#allocation5], 4
      %s34 = int_to_ptr.vmem [resolvable:$true] %s33
      %39 = dma.hbm_to_vmem [thread:$0]  %s1, 256, %s34, [#allocation6], 64, 64, 4
    $region9: #{tpu_custom_call.1} parent=1 // pred_fallthru
      _
    // Predicated region
    $region10: #{tpu_custom_call.1} parent=1 // pred_check
      _
    $region11: #{tpu_custom_call.1} parent=1 // pred_check_branch
      %41 = sbr.rel (0) target = $region13
    $region12: #{tpu_custom_call.1} parent=1 // pred_region
      _
    $region13: #{tpu_custom_call.1} parent=1 // pred_fallthru
      _
    // Predicated region
    $region14: #{tpu_custom_call.1} parent=1 // pred_check
      _
    $region15: #{tpu_custom_call.1} parent=1 // pred_check_branch
      %43 = sbr.rel (0) target = $region17
    $region16: #{tpu_custom_call.1} parent=1 // pred_region
      _
    $region17: #{tpu_custom_call.1} parent=1 // pred_fallthru
      _
    // Predicated region
    $region18: #{tpu_custom_call.1} parent=1 // pred_check
      _
    $region19: #{tpu_custom_call.1} parent=1 // pred_check_branch
      %45 = sbr.rel (0) target = $region21
    $region20: #{tpu_custom_call.1} parent=1 // pred_region
      %s47 = ssub.s32 1024, 1024
      %48 = vsyncadd [#allocation6], %s47
      %s49 = sshll.u32 [#allocation7], 4
      %s50 = int_to_ptr.vmem [resolvable:$true] %s49
      %55 = dma.hbm_to_vmem [thread:$0]  %s4, 1024, %s50, [#allocation6], 64, 64, 4
    $region21: #{tpu_custom_call.1} parent=1 // pred_fallthru
      _
    // Predicated region
    $region22: #{tpu_custom_call.1} parent=1 // pred_check
      _
    $region23: #{tpu_custom_call.1} parent=1 // pred_check_branch
      %57 = sbr.rel (0) target = $region25
    $region24: #{tpu_custom_call.1} parent=1 // pred_region
      _
    $region25: #{tpu_custom_call.1} parent=1 // pred_fallthru
      _
    // Predicated region
    $region26: #{tpu_custom_call.1} parent=1 // pred_check
      _
    $region27: #{tpu_custom_call.1} parent=1 // pred_check_branch
      %59 = sbr.rel (0) target = $region29
    $region28: #{tpu_custom_call.1} parent=1 // pred_region
      _
    $region29: #{tpu_custom_call.1} parent=1 // pred_fallthru
      _
    // Predicated region
    $region30: #{tpu_custom_call.1} parent=1 // pred_check
      _
    $region31: #{tpu_custom_call.1} parent=1 // pred_check_branch
      %61 = sbr.rel (0) target = $region33
    $region32: #{tpu_custom_call.1} parent=1 // pred_region
      %s63 = ssub.s32 2048, 2048
      %64 = vsyncadd [#allocation9], %s63
      %s65 = sshll.u32 [#allocation8], 4
      %s66 = int_to_ptr.vmem [resolvable:$true] %s65
      %71 = dma.hbm_to_vmem [thread:$0]  %s7, 2048, %s66, [#allocation9], 128, 128, 8
    $region33: #{tpu_custom_call.1} parent=1 // pred_fallthru
      _
    // Predicated region
    $region34: #{tpu_custom_call.1} parent=1 // pred_check
      _
    $region35: #{tpu_custom_call.1} parent=1 // pred_check_branch
      %73 = sbr.rel (0) target = $region37
    $region36: #{tpu_custom_call.1} parent=1 // pred_region
      _
    $region37: #{tpu_custom_call.1} parent=1 // pred_fallthru
      _
    // Predicated region
    $region38: #{tpu_custom_call.1} parent=1 // pred_check
      _
    $region39: #{tpu_custom_call.1} parent=1 // pred_check_branch
      %75 = sbr.rel (0) target = $region41
    $region40: #{tpu_custom_call.1} parent=1 // pred_region
      %76 = dma.done [#allocation3], 128
    $region41: #{tpu_custom_call.1} parent=1 // pred_fallthru
      _
    // Predicated region
    $region42: #{tpu_custom_call.1} parent=1 // pred_check
      _
    $region43: #{tpu_custom_call.1} parent=1 // pred_check_branch
      %78 = sbr.rel (0) target = $region45
    $region44: #{tpu_custom_call.1} parent=1 // pred_region
      %79 = dma.done [#allocation6], 256
    $region45: #{tpu_custom_call.1} parent=1 // pred_fallthru
      _
    // Predicated region
    $region46: #{tpu_custom_call.1} parent=1 // pred_check
      _
    $region47: #{tpu_custom_call.1} parent=1 // pred_check_branch
      %81 = sbr.rel (0) target = $region49
    $region48: #{tpu_custom_call.1} parent=1 // pred_region
      %82 = dma.done [#allocation6], 1024
    $region49: #{tpu_custom_call.1} parent=1 // pred_fallthru
      _
    // Predicated region
    $region50: #{tpu_custom_call.1} parent=1 // pred_check
      _
    $region51: #{tpu_custom_call.1} parent=1 // pred_check_branch
      %84 = sbr.rel (0) target = $region53
    $region52: #{tpu_custom_call.1} parent=1 // pred_region
      %85 = dma.done [#allocation9], 2048
    $region53: #{tpu_custom_call.1} parent=1 // pred_fallthru
      _
    %v87 = vld [vmem:[#allocation2] sm:$0xff]
    %v88 = vld [vmem:[#allocation5] sm:$0xf]
    %v89 = vld [vmem:[#allocation5 + $0x4] sm:$0xf]
    %v90 = vld [vmem:[#allocation5 + $0x8] sm:$0xf]
    %v91 = vld [vmem:[#allocation5 + $0xc] sm:$0xf]
    %v92 = vpack.c.bf16 %v87, %v87
    %v97 = vunpack.c.l.b16 %v88
    %v98 = vunpack.c.l.b16 %v89
    %v99 = vunpack.c.l.b16 %v90
    %v100 = vunpack.c.l.b16 %v91
    %v101 = vpack.c.b16 %v98, %v97
    %v102 = vpack.c.b16 %v100, %v99
    %vm105 = vcmask 261120
    %v107 = vsel %vm105, %v92, 0
    %109 = vmatprep.subr.bf16.mxu0 0
    %110 = vmatpush1.bf16.msra.mxu0 %v101
    %111 = vmatprep.subr.bf16.mxu0 0
    %112 = vmatpush1.bf16.msra.mxu0 %v102
    %113 = vmatprep.subr.bf16.mxu0 0
    %114 = vmatpush1.bf16.msra.mxu0 0
    %115 = vmatprep.subr.bf16.mxu0 0
    %116 = vmatpush1.bf16.msra.mxu0 0
    %117 = vmatprep.subr.bf16.mxu0 0
    %118 = vmatpush1.bf16.msra.mxu0 0
    %119 = vmatprep.subr.bf16.mxu0 0
    %120 = vmatpush1.bf16.msra.mxu0 0
    %121 = vmatprep.subr.bf16.mxu0 0
    %122 = vmatpush1.bf16.msra.mxu0 0
    %123 = vmatprep.subr.bf16.mxu0 0
    %124 = vmatpush1.bf16.msra.mxu0 0
    %125 = vmatprep.subr.bf16.mxu0 0
    %126 = vmatpush1.bf16.msra.mxu0 0
    %127 = vmatprep.subr.bf16.mxu0 0
    %128 = vmatpush1.bf16.msra.mxu0 0
    %129 = vmatprep.subr.bf16.mxu0 0
    %130 = vmatpush1.bf16.msra.mxu0 0
    %131 = vmatprep.subr.bf16.mxu0 0
    %132 = vmatpush1.bf16.msra.mxu0 0
    %133 = vmatprep.subr.bf16.mxu0 0
    %134 = vmatpush1.bf16.msra.mxu0 0
    %135 = vmatprep.subr.bf16.mxu0 0
    %136 = vmatpush1.bf16.msra.mxu0 0
    %137 = vmatprep.subr.bf16.mxu0 0
    %138 = vmatpush1.bf16.msra.mxu0 0
    %139 = vmatprep.subr.bf16.mxu0 0
    %140 = vmatpush1.bf16.msra.mxu0 0
    %141 = vmatprep.mubr.bf16.mxu0 0
    %142 = vmatmul.mubr.bf16.gmra.mrb[0].mxu0 %v107
    %v143 = vpop.f32.mrb[0].mxu0
    %v144 = vadd.f32 0.0, %v143
    %v145 = vpop.f32.mrb[0].mxu0
    %v146 = vpop.f32.mrb[0].mxu0
    %v147 = vpop.f32.mrb[0].mxu0
    %148 = vdwg.mxu0
    %v149 = vld [vmem:[%s2] sm:$0x1]
    %v150 = vld [vmem:[%s3] sm:$0x1]
    %v151 = vrot.slane %v144, 4
    %v152 = vadd.f32 %v144, %v151
    %v153 = vrot.slane %v152, 2
    %v154 = vadd.f32 %v152, %v153
    %v155 = vrot.slane %v154, 1
    %v156 = vadd.f32 %v154, %v155
    %v157 = vmul.f32 %v156, 0.125
    %v158 = vmul.f32 %v144, %v144
    %v159 = vrot.slane %v158, 4
    %v160 = vadd.f32 %v158, %v159
    %v161 = vrot.slane %v160, 2
    %v162 = vadd.f32 %v160, %v161
    %v163 = vrot.slane %v162, 1
    %v164 = vadd.f32 %v162, %v163
    %v165 = vmul.f32 %v164, 0.125
    %v166 = vmul.f32 %v157, %v157
    %v167 = vsub.f32 %v165, %v166
    %v168 = vmax.f32 %v167, 0.0
    %v169 = vadd.f32 %v168, 1e-05
    %v170 = vrsqrt.pop %v169
    %v171 = vmul.f32 %v170, %v149
    %v172 = vsub.f32 %v144, %v157
    %v173 = vlaneseq
    %v174 = vshrl.u32 %v173, 7
    %v175 = vsub.s32 0, %v174
    %v176 = vrot.slane %v171, %v175
    %v177 = vmul.f32 %v172, %v176
    %v179 = vlaneseq
    %v180 = vshrl.u32 %v179, 7
    %v181 = vsub.s32 0, %v180
    %v182 = vrot.slane %v150, %v181
    %v184 = vadd.f32 %v177, %v182
    %v185 = vmax.f32 %v184, 0.0
    %v186 = vld [vmem:[#allocation7] sm:$0xf]
    %v187 = vld [vmem:[#allocation7 + $0x4] sm:$0xf]
    %v188 = vld [vmem:[#allocation7 + $0x8] sm:$0xf]
    %v189 = vld [vmem:[#allocation7 + $0xc] sm:$0xf]
    %v190 = vld [vmem:[#allocation7 + $0x10] sm:$0xf]
    %v191 = vld [vmem:[#allocation7 + $0x14] sm:$0xf]
    %v192 = vld [vmem:[#allocation7 + $0x18] sm:$0xf]
    %v193 = vld [vmem:[#allocation7 + $0x1c] sm:$0xf]
    %v194 = vld [vmem:[#allocation7 + $0x20] sm:$0xf]
    %v195 = vld [vmem:[#allocation7 + $0x24] sm:$0xf]
    %v196 = vld [vmem:[#allocation7 + $0x28] sm:$0xf]
    %v197 = vld [vmem:[#allocation7 + $0x2c] sm:$0xf]
    %v198 = vld [vmem:[#allocation7 + $0x30] sm:$0xf]
    %v199 = vld [vmem:[#allocation7 + $0x34] sm:$0xf]
    %v200 = vld [vmem:[#allocation7 + $0x38] sm:$0xf]
    %v201 = vld [vmem:[#allocation7 + $0x3c] sm:$0xf]
    %v202 = vpack.c.bf16 %v185, %v185
    %v219 = vunpack.c.l.b16 %v186
    %v220 = vunpack.c.l.b16 %v187
    %v221 = vunpack.c.l.b16 %v188
    %v222 = vunpack.c.l.b16 %v189
    %v223 = vunpack.c.l.b16 %v190
    %v224 = vunpack.c.l.b16 %v191
    %v225 = vunpack.c.l.b16 %v192
    %v226 = vunpack.c.l.b16 %v193
    %v227 = vunpack.c.l.b16 %v194
    %v228 = vunpack.c.l.b16 %v195
    %v229 = vunpack.c.l.b16 %v196
    %v230 = vunpack.c.l.b16 %v197
    %v231 = vunpack.c.l.b16 %v198
    %v232 = vunpack.c.l.b16 %v199
    %v233 = vunpack.c.l.b16 %v200
    %v234 = vunpack.c.l.b16 %v201
    %v235 = vpack.c.b16 %v220, %v219
    %v236 = vpack.c.b16 %v222, %v221
    %v237 = vpack.c.b16 %v224, %v223
    %v238 = vpack.c.b16 %v226, %v225
    %v239 = vpack.c.b16 %v228, %v227
    %v240 = vpack.c.b16 %v230, %v229
    %v241 = vpack.c.b16 %v232, %v231
    %v242 = vpack.c.b16 %v234, %v233
    %251 = vmatprep.subr.bf16.mxu0 0
    %252 = vmatpush1.bf16.msra.mxu0 %v235
    %253 = vmatprep.subr.bf16.mxu0 0
    %254 = vmatpush1.bf16.msra.mxu0 %v236
    %255 = vmatprep.subr.bf16.mxu0 0
    %256 = vmatpush1.bf16.msra.mxu0 %v237
    %257 = vmatprep.subr.bf16.mxu0 0
    %258 = vmatpush1.bf16.msra.mxu0 %v238
    %259 = vmatprep.subr.bf16.mxu0 0
    %260 = vmatpush1.bf16.msra.mxu0 %v239
    %261 = vmatprep.subr.bf16.mxu0 0
    %262 = vmatpush1.bf16.msra.mxu0 %v240
    %263 = vmatprep.subr.bf16.mxu0 0
    %264 = vmatpush1.bf16.msra.mxu0 %v241
    %265 = vmatprep.subr.bf16.mxu0 0
    %266 = vmatpush1.bf16.msra.mxu0 %v242
    %267 = vmatprep.subr.bf16.mxu0 0
    %268 = vmatpush1.bf16.msra.mxu0 0
    %269 = vmatprep.subr.bf16.mxu0 0
    %270 = vmatpush1.bf16.msra.mxu0 0
    %271 = vmatprep.subr.bf16.mxu0 0
    %272 = vmatpush1.bf16.msra.mxu0 0
    %273 = vmatprep.subr.bf16.mxu0 0
    %274 = vmatpush1.bf16.msra.mxu0 0
    %275 = vmatprep.subr.bf16.mxu0 0
    %276 = vmatpush1.bf16.msra.mxu0 0
    %277 = vmatprep.subr.bf16.mxu0 0
    %278 = vmatpush1.bf16.msra.mxu0 0
    %279 = vmatprep.subr.bf16.mxu0 0
    %280 = vmatpush1.bf16.msra.mxu0 0
    %281 = vmatprep.subr.bf16.mxu0 0
    %282 = vmatpush1.bf16.msra.mxu0 0
    %283 = vmatprep.mubr.bf16.mxu0 0
    %284 = vmatmul.mubr.bf16.gmra.mrb[0].mxu0 %v202
    %v285 = vpop.f32.mrb[0].mxu0
    %v286 = vadd.f32 0.0, %v285
    %v287 = vpop.f32.mrb[0].mxu0
    %v288 = vpop.f32.mrb[0].mxu0
    %v289 = vpop.f32.mrb[0].mxu0
    %290 = vdwg.mxu0
    %v291 = vld [vmem:[%s5] sm:$0x1]
    %v292 = vld [vmem:[%s6] sm:$0x1]
    %v293 = vrot.slane %v286, 4
    %v294 = vadd.f32 %v286, %v293
    %v295 = vrot.slane %v294, 2
    %v296 = vadd.f32 %v294, %v295
    %v297 = vrot.slane %v296, 1
    %v298 = vadd.f32 %v296, %v297
    %v299 = vmul.f32 %v298, 0.125
    %v300 = vmul.f32 %v286, %v286
    %v301 = vrot.slane %v300, 4
    %v302 = vadd.f32 %v300, %v301
    %v303 = vrot.slane %v302, 2
    %v304 = vadd.f32 %v302, %v303
    %v305 = vrot.slane %v304, 1
    %v306 = vadd.f32 %v304, %v305
    %v307 = vmul.f32 %v306, 0.125
    %v308 = vmul.f32 %v299, %v299
    %v309 = vsub.f32 %v307, %v308
    %v310 = vmax.f32 %v309, 0.0
    %v311 = vadd.f32 %v310, 1e-05
    %v312 = vrsqrt.pop %v311
    %v313 = vmul.f32 %v312, %v291
    %v314 = vsub.f32 %v286, %v299
    %v315 = vlaneseq
    %v316 = vshrl.u32 %v315, 7
    %v317 = vsub.s32 0, %v316
    %v318 = vrot.slane %v313, %v317
    %v319 = vmul.f32 %v314, %v318
    %v321 = vlaneseq
    %v322 = vshrl.u32 %v321, 7
    %v323 = vsub.s32 0, %v322
    %v324 = vrot.slane %v292, %v323
    %v326 = vadd.f32 %v319, %v324
    %v327 = vmax.f32 %v326, 0.0
    %v328 = vld [vmem:[#allocation8] sm:$0xff]
    %v329 = vld [vmem:[#allocation8 + $0x8] sm:$0xff]
    %v330 = vld [vmem:[#allocation8 + $0x10] sm:$0xff]
    %v331 = vld [vmem:[#allocation8 + $0x18] sm:$0xff]
    %v332 = vld [vmem:[#allocation8 + $0x20] sm:$0xff]
    %v333 = vld [vmem:[#allocation8 + $0x28] sm:$0xff]
    %v334 = vld [vmem:[#allocation8 + $0x30] sm:$0xff]
    %v335 = vld [vmem:[#allocation8 + $0x38] sm:$0xff]
    %v336 = vld [vmem:[#allocation8 + $0x40] sm:$0xff]
    %v337 = vld [vmem:[#allocation8 + $0x48] sm:$0xff]
    %v338 = vld [vmem:[#allocation8 + $0x50] sm:$0xff]
    %v339 = vld [vmem:[#allocation8 + $0x58] sm:$0xff]
    %v340 = vld [vmem:[#allocation8 + $0x60] sm:$0xff]
    %v341 = vld [vmem:[#allocation8 + $0x68] sm:$0xff]
    %v342 = vld [vmem:[#allocation8 + $0x70] sm:$0xff]
    %v343 = vld [vmem:[#allocation8 + $0x78] sm:$0xff]
    %v344 = vpack.c.bf16 %v327, %v327
    %v345 = vld [vmem:[%s8] sm:$0x3]
    %v347 = vlaneseq
    %v348 = vshrl.u32 %v347, 7
    %v349 = vsub.s32 0, %v348
    %v350 = vrot.slane %v345, %v349
    %v351 = vlaneseq
    %v352 = vshrl.u32 %v351, 7
    %v353 = vsub.s32 1, %v352
    %v354 = vrot.slane %v345, %v353
    %v373 = vunpack.c.l.b16 %v328
    %v374 = vunpack.c.h.b16 %v328
    %v375 = vunpack.c.l.b16 %v329
    %v376 = vunpack.c.h.b16 %v329
    %v377 = vunpack.c.l.b16 %v330
    %v378 = vunpack.c.h.b16 %v330
    %v379 = vunpack.c.l.b16 %v331
    %v380 = vunpack.c.h.b16 %v331
    %v381 = vunpack.c.l.b16 %v332
    %v382 = vunpack.c.h.b16 %v332
    %v383 = vunpack.c.l.b16 %v333
    %v384 = vunpack.c.h.b16 %v333
    %v385 = vunpack.c.l.b16 %v334
    %v386 = vunpack.c.h.b16 %v334
    %v387 = vunpack.c.l.b16 %v335
    %v388 = vunpack.c.h.b16 %v335
    %v389 = vunpack.c.l.b16 %v336
    %v390 = vunpack.c.h.b16 %v336
    %v391 = vunpack.c.l.b16 %v337
    %v392 = vunpack.c.h.b16 %v337
    %v393 = vunpack.c.l.b16 %v338
    %v394 = vunpack.c.h.b16 %v338
    %v395 = vunpack.c.l.b16 %v339
    %v396 = vunpack.c.h.b16 %v339
    %v397 = vunpack.c.l.b16 %v340
    %v398 = vunpack.c.h.b16 %v340
    %v399 = vunpack.c.l.b16 %v341
    %v400 = vunpack.c.h.b16 %v341
    %v401 = vunpack.c.l.b16 %v342
    %v402 = vunpack.c.h.b16 %v342
    %v403 = vunpack.c.l.b16 %v343
    %v404 = vunpack.c.h.b16 %v343
    %v405 = vpack.c.b16 %v375, %v373
    %v406 = vpack.c.b16 %v376, %v374
    %v407 = vpack.c.b16 %v379, %v377
    %v408 = vpack.c.b16 %v380, %v378
    %v409 = vpack.c.b16 %v383, %v381
    %v410 = vpack.c.b16 %v384, %v382
    %v411 = vpack.c.b16 %v387, %v385
    %v412 = vpack.c.b16 %v388, %v386
    %v413 = vpack.c.b16 %v391, %v389
    %v414 = vpack.c.b16 %v392, %v390
    %v415 = vpack.c.b16 %v395, %v393
    %v416 = vpack.c.b16 %v396, %v394
    %v417 = vpack.c.b16 %v399, %v397
    %v418 = vpack.c.b16 %v400, %v398
    %v419 = vpack.c.b16 %v403, %v401
    %v420 = vpack.c.b16 %v404, %v402
    %437 = vmatprep.subr.bf16.mxu0 %v406
    %438 = vmatpush1.bf16.msra.mxu0 %v405
    %439 = vmatprep.subr.bf16.mxu0 %v408
    %440 = vmatpush1.bf16.msra.mxu0 %v407
    %441 = vmatprep.subr.bf16.mxu0 %v410
    %442 = vmatpush1.bf16.msra.mxu0 %v409
    %443 = vmatprep.subr.bf16.mxu0 %v412
    %444 = vmatpush1.bf16.msra.mxu0 %v411
    %445 = vmatprep.subr.bf16.mxu0 %v414
    %446 = vmatpush1.bf16.msra.mxu0 %v413
    %447 = vmatprep.subr.bf16.mxu0 %v416
    %448 = vmatpush1.bf16.msra.mxu0 %v415
    %449 = vmatprep.subr.bf16.mxu0 %v418
    %450 = vmatpush1.bf16.msra.mxu0 %v417
    %451 = vmatprep.subr.bf16.mxu0 %v420
    %452 = vmatpush1.bf16.msra.mxu0 %v419
    %453 = vmatprep.subr.bf16.mxu0 0
    %454 = vmatpush1.bf16.msra.mxu0 0
    %455 = vmatprep.subr.bf16.mxu0 0
    %456 = vmatpush1.bf16.msra.mxu0 0
    %457 = vmatprep.subr.bf16.mxu0 0
    %458 = vmatpush1.bf16.msra.mxu0 0
    %459 = vmatprep.subr.bf16.mxu0 0
    %460 = vmatpush1.bf16.msra.mxu0 0
    %461 = vmatprep.subr.bf16.mxu0 0
    %462 = vmatpush1.bf16.msra.mxu0 0
    %463 = vmatprep.subr.bf16.mxu0 0
    %464 = vmatpush1.bf16.msra.mxu0 0
    %465 = vmatprep.subr.bf16.mxu0 0
    %466 = vmatpush1.bf16.msra.mxu0 0
    %467 = vmatprep.subr.bf16.mxu0 0
    %468 = vmatpush1.bf16.msra.mxu0 0
    %469 = vmatprep.mubr.bf16.mxu0 0
    %470 = vmatmul.mubr.bf16.gmra.mrb[0].mxu0 %v344
    %v471 = vpop.f32.mrb[0].mxu0
    %v472 = vadd.f32 %v350, %v471
    %v473 = vpop.f32.mrb[0].mxu0
    %v474 = vadd.f32 %v354, %v473
    %v475 = vpop.f32.mrb[0].mxu0
    %v476 = vpop.f32.mrb[0].mxu0
    %477 = vdwg.mxu0
    %478 = vst [vmem:[#allocation10] sm:$0xff] %v472
    %479 = vst [vmem:[#allocation10 + $0x8] sm:$0xff] %v474
    // Predicated region
    $region54: #{tpu_custom_call.1} parent=1 // pred_check
      _
    $region55: #{tpu_custom_call.1} parent=1 // pred_check_branch
      %481 = sbr.rel (0) target = $region57
    $region56: #{tpu_custom_call.1} parent=1 // pred_region
      %s483 = ssub.s32 256, 256
      %484 = vsyncadd [#allocation4], %s483
      %s486 = sshll.u32 [#allocation10], 4
      %s487 = int_to_ptr.vmem [resolvable:$true] %s486
      %489 = dma.vmem_to_hbm [thread:$0]  %s487, 256, %s9, [#allocation4]
    $region57: #{tpu_custom_call.1} parent=1 // pred_fallthru
      _
    // Predicated region
    $region58: #{tpu_custom_call.1} parent=1 // pred_check
      _
    $region59: #{tpu_custom_call.1} parent=1 // pred_check_branch
      %491 = sbr.rel (0) target = $region61
    $region60: #{tpu_custom_call.1} parent=1 // pred_region
      %492 = dma.done [#allocation4], 256
    $region61: #{tpu_custom_call.1} parent=1 // pred_fallthru
      _
    %493 = vsyncpa [#allocation3], 1
    %494 = vsyncpa [#allocation6], 1
    %495 = vsyncpa [#allocation9], 1
    %496 = vsyncpa [#allocation4], 1

</llo_original>
